<compile_context>
chip_gen: v7x
topology: tpu7x:2x2x1
jax: 0.10.0
libtpu: 0.0.40
codegen_flags: <defaults>
</compile_context>

<pallas_src>
import functools

import jax
import jax.numpy as jnp
import numpy as np
from jax.experimental import pallas as pl
from jax.experimental.pallas import tpu as pltpu


def _std_wd_kernel(x_ref, wd_ref, sigma_base_ref, *, n_steps, th):
    x = x_ref[...]                                   # [TB, T] float32
    TB, T = x.shape
    w_out = T - n_steps + 1                          # number of valid windows
    shift_begin = (n_steps - 1) // 2

    # Center each row by its full-row mean (std is shift-invariant); makes the
    # single-pass E[x^2]-E[x]^2 variance numerically robust.
    x = x - jnp.mean(x, axis=-1, keepdims=True)

    # --- single-pass rolling sums at full lane width (XLU rolls, no slices) --
    inv_n = 1.0 / float(n_steps)
    s = x
    s2 = x * x
    for j in range(1, n_steps):                      # n_steps is a static int
        xj = pltpu.roll(x, (T - j) % T, 1)           # == roll by -j along lanes
        s = s + xj
        s2 = s2 + xj * xj

    mean = s * inv_n
    var = jnp.maximum(s2 * inv_n - mean * mean, 0.0)
    sigma = jnp.sqrt(var)                            # valid for lane t < w_out
    # (lanes >= w_out contain wrapped-window garbage; masked to zero below)

    # --- place into padded output: out[p] = sigma[p - shift_begin] ----------
    sigma_shifted = pltpu.roll(sigma, shift_begin, 1)
    lane = jax.lax.broadcasted_iota(jnp.int32, (TB, T), 1)
    valid = (lane >= shift_begin) & (lane < shift_begin + w_out)
    sigma_base = jnp.where(valid, sigma_shifted, 0.0)
    sigma_base_ref[...] = sigma_base                 # full-width, unmasked store

    # --- thresholding / straight-through forward value ----------------------
    sigma_n = sigma_base * (1.0 / (2.0 * th))
    # sigma_n >= 0, so round(sigma_n) >= 0 and the max(·, 0) of the reference
    # is a no-op; keep round + min(·, 1) for exact semantics.
    wd_ref[...] = jnp.minimum(jnp.round(sigma_n), 1.0)


def _pick_batch_tile(B, T, target_tile_bytes=2 * 1024 * 1024):
    """Rows per batch tile: multiple of 8 (f32 sublane), ~2 MiB per tile."""
    bytes_per_row = 4 * T
    tb = (target_tile_bytes // bytes_per_row) // 8 * 8
    tb = max(8, min(tb, 1024))
    b_pad8 = ((B + 7) // 8) * 8
    return min(tb, b_pad8)


def std_wet_dry(x, th, n_steps):
    """x: float [B, T] attenuation. Returns (wet_dry [B,T], sigma_base [B,T])."""
    x = jnp.asarray(x, jnp.float32)
    B, T = x.shape
    assert T >= n_steps, "sequence must be at least n_steps long"

    tb = _pick_batch_tile(B, T)
    b_pad = pl.cdiv(B, tb) * tb
    if b_pad != B:
        x = jnp.pad(x, ((0, b_pad - B), (0, 0)))

    kernel = functools.partial(_std_wd_kernel, n_steps=int(n_steps), th=float(th))
    out_shape = (
        jax.ShapeDtypeStruct((b_pad, T), jnp.float32),
        jax.ShapeDtypeStruct((b_pad, T), jnp.float32),
    )
    wd, sigma_base = pl.pallas_call(
        kernel,
        out_shape=out_shape,
        grid=(b_pad // tb,),
        in_specs=[pl.BlockSpec((tb, T), lambda i: (i, 0))],
        out_specs=(
            pl.BlockSpec((tb, T), lambda i: (i, 0)),
            pl.BlockSpec((tb, T), lambda i: (i, 0)),
        ),
        compiler_params=pltpu.CompilerParams(
            dimension_semantics=("parallel",)),
    )(x)

    if b_pad != B:
        wd = wd[:B]
        sigma_base = sigma_base[:B]
    return wd, sigma_base


def _reference(x, th, n_steps):
    """Pure numpy reference mirroring the PyTorch forward."""
    x = np.asarray(x, np.float32)
    B, T = x.shape
    shift_begin = (n_steps - 1) // 2
    shift_end = n_steps - 1 - shift_begin
    cols = []
    for i in range(n_steps - 1, T):
        w = x[:, max(0, i - n_steps + 1):i + 1]
        cols.append(w.std(axis=1))                   # biased (unbiased=False)
    sigma_base = np.concatenate(
        [np.zeros((B, shift_begin), np.float32),
         np.stack(cols, axis=1).astype(np.float32),
         np.zeros((B, shift_end), np.float32)], axis=1)
    sigma_n = sigma_base / (2.0 * th)
    res = np.minimum(np.round(sigma_n), 1.0)         # np.round is half-to-even
    res = np.maximum(res, 0.0)
    return res.astype(np.float32), sigma_base


if __name__ == "__main__":
    th = 0.5
    n_steps = 8
    B, T = 2, 16

    key = jax.random.PRNGKey(0)
    x = jax.random.normal(key, (B, T), dtype=jnp.float32)

    wd, sigma_base = std_wet_dry(x, th, n_steps)
    jax.block_until_ready((wd, sigma_base))

    wd_ref, sigma_ref = _reference(np.asarray(x), th, n_steps)
    np.testing.assert_allclose(np.asarray(sigma_base), sigma_ref, rtol=1e-5, atol=1e-5)
    np.testing.assert_allclose(np.asarray(wd), wd_ref, rtol=1e-5, atol=1e-5)

    print("KERNEL_OK")
</pallas_src>

<mosaic_0001>
module attributes {stable_mosaic.version = 11 : i64} {
  func.func @_std_wd_kernel(%arg0: i32, %arg1: memref<8x16xf32, #tpu.memory_space<vmem>>, %arg2: memref<8x16xf32, #tpu.memory_space<vmem>>, %arg3: memref<8x16xf32, #tpu.memory_space<vmem>>) attributes {dimension_semantics = [#tpu.dimension_semantics<parallel>], iteration_bounds = array<i64: 1>, scalar_prefetch = 0 : i64, scratch_operands = 0 : i64, tpu.core_type = #tpu.core_type<tc>, window_params = [{transform_indices = @transform_0, window_bounds = array<i64: 8, 16>}, {transform_indices = @transform_1, window_bounds = array<i64: 8, 16>}, {transform_indices = @transform_2, window_bounds = array<i64: 8, 16>}]} {
    %c0 = arith.constant 0 : index
    %c0_0 = arith.constant 0 : index
    %0 = vector.load %arg1[%c0, %c0_0] : memref<8x16xf32, #tpu.memory_space<vmem>>, vector<8x16xf32>
    %cst = arith.constant dense<0.000000e+00> : vector<8xf32>
    %1 = vector.multi_reduction <add>, %0, %cst [1] : vector<8x16xf32> to vector<8xf32>
    %2 = vector.shape_cast %1 : vector<8xf32> to vector<8x1xf32>
    %cst_1 = arith.constant 1.600000e+01 : f32
    %3 = vector.broadcast %cst_1 : f32 to vector<8x1xf32>
    %4 = arith.divf %2, %3 : vector<8x1xf32>
    %5 = vector.broadcast %4 : vector<8x1xf32> to vector<8x16xf32>
    %6 = arith.subf %0, %5 : vector<8x16xf32>
    %7 = arith.mulf %6, %6 : vector<8x16xf32>
    %c15_i32 = arith.constant 15 : i32
    %8 = tpu.dynamic_rotate %6 by %c15_i32 dim 1 : vector<8x16xf32>, i32 -> vector<8x16xf32>
    %9 = arith.addf %6, %8 : vector<8x16xf32>
    %10 = arith.mulf %8, %8 : vector<8x16xf32>
    %11 = arith.addf %7, %10 : vector<8x16xf32>
    %c14_i32 = arith.constant 14 : i32
    %12 = tpu.dynamic_rotate %6 by %c14_i32 dim 1 : vector<8x16xf32>, i32 -> vector<8x16xf32>
    %13 = arith.addf %9, %12 : vector<8x16xf32>
    %14 = arith.mulf %12, %12 : vector<8x16xf32>
    %15 = arith.addf %11, %14 : vector<8x16xf32>
    %c13_i32 = arith.constant 13 : i32
    %16 = tpu.dynamic_rotate %6 by %c13_i32 dim 1 : vector<8x16xf32>, i32 -> vector<8x16xf32>
    %17 = arith.addf %13, %16 : vector<8x16xf32>
    %18 = arith.mulf %16, %16 : vector<8x16xf32>
    %19 = arith.addf %15, %18 : vector<8x16xf32>
    %c12_i32 = arith.constant 12 : i32
    %20 = tpu.dynamic_rotate %6 by %c12_i32 dim 1 : vector<8x16xf32>, i32 -> vector<8x16xf32>
    %21 = arith.addf %17, %20 : vector<8x16xf32>
    %22 = arith.mulf %20, %20 : vector<8x16xf32>
    %23 = arith.addf %19, %22 : vector<8x16xf32>
    %c11_i32 = arith.constant 11 : i32
    %24 = tpu.dynamic_rotate %6 by %c11_i32 dim 1 : vector<8x16xf32>, i32 -> vector<8x16xf32>
    %25 = arith.addf %21, %24 : vector<8x16xf32>
    %26 = arith.mulf %24, %24 : vector<8x16xf32>
    %27 = arith.addf %23, %26 : vector<8x16xf32>
    %c10_i32 = arith.constant 10 : i32
    %28 = tpu.dynamic_rotate %6 by %c10_i32 dim 1 : vector<8x16xf32>, i32 -> vector<8x16xf32>
    %29 = arith.addf %25, %28 : vector<8x16xf32>
    %30 = arith.mulf %28, %28 : vector<8x16xf32>
    %31 = arith.addf %27, %30 : vector<8x16xf32>
    %c9_i32 = arith.constant 9 : i32
    %32 = tpu.dynamic_rotate %6 by %c9_i32 dim 1 : vector<8x16xf32>, i32 -> vector<8x16xf32>
    %33 = arith.addf %29, %32 : vector<8x16xf32>
    %34 = arith.mulf %32, %32 : vector<8x16xf32>
    %35 = arith.addf %31, %34 : vector<8x16xf32>
    %cst_2 = arith.constant 1.250000e-01 : f32
    %36 = vector.broadcast %cst_2 : f32 to vector<8x16xf32>
    %37 = arith.mulf %33, %36 : vector<8x16xf32>
    %cst_3 = arith.constant 1.250000e-01 : f32
    %38 = vector.broadcast %cst_3 : f32 to vector<8x16xf32>
    %39 = arith.mulf %35, %38 : vector<8x16xf32>
    %40 = arith.mulf %37, %37 : vector<8x16xf32>
    %41 = arith.subf %39, %40 : vector<8x16xf32>
    %cst_4 = arith.constant 0.000000e+00 : f32
    %42 = vector.broadcast %cst_4 : f32 to vector<8x16xf32>
    %43 = arith.maximumf %41, %42 : vector<8x16xf32>
    %44 = math.sqrt %43 : vector<8x16xf32>
    %c3_i32 = arith.constant 3 : i32
    %45 = tpu.dynamic_rotate %44 by %c3_i32 dim 1 : vector<8x16xf32>, i32 -> vector<8x16xf32>
    %46 = tpu.iota {dimensions = array<i32: 1>} : vector<8x16xi32>
    %c3_i32_5 = arith.constant 3 : i32
    %47 = vector.broadcast %c3_i32_5 : i32 to vector<8x16xi32>
    %48 = arith.cmpi sge, %46, %47 : vector<8x16xi32>
    %c12_i32_6 = arith.constant 12 : i32
    %49 = vector.broadcast %c12_i32_6 : i32 to vector<8x16xi32>
    %50 = arith.cmpi slt, %46, %49 : vector<8x16xi32>
    %51 = arith.andi %48, %50 : vector<8x16xi1>
    %cst_7 = arith.constant 0.000000e+00 : f32
    %52 = vector.broadcast %cst_7 : f32 to vector<8x16xf32>
    %53 = arith.select %51, %45, %52 : vector<8x16xi1>, vector<8x16xf32>
    %c0_8 = arith.constant 0 : index
    %c0_9 = arith.constant 0 : index
    %54 = vector.load %arg3[%c0_8, %c0_9] : memref<8x16xf32, #tpu.memory_space<vmem>>, vector<8x16xf32>
    tpu.vector_store %arg3[%c0_8, %c0_9], %53 {strides = array<i32>} : memref<8x16xf32, #tpu.memory_space<vmem>>, vector<8x16xf32>,
    %cst_10 = arith.constant 1.000000e+00 : f32
    %55 = vector.broadcast %cst_10 : f32 to vector<8x16xf32>
    %56 = arith.mulf %53, %55 : vector<8x16xf32>
    %57 = math.roundeven %56 : vector<8x16xf32>
    %cst_11 = arith.constant 1.000000e+00 : f32
    %58 = vector.broadcast %cst_11 : f32 to vector<8x16xf32>
    %59 = arith.minimumf %57, %58 : vector<8x16xf32>
    %c0_12 = arith.constant 0 : index
    %c0_13 = arith.constant 0 : index
    %60 = vector.load %arg2[%c0_12, %c0_13] : memref<8x16xf32, #tpu.memory_space<vmem>>, vector<8x16xf32>
    tpu.vector_store %arg2[%c0_12, %c0_13], %59 {strides = array<i32>} : memref<8x16xf32, #tpu.memory_space<vmem>>, vector<8x16xf32>,
    return
  }
  func.func @transform_0(%arg0: i32) -> (i32, i32) {
    %c0_i32 = arith.constant 0 : i32
    %c0_i32_0 = arith.constant 0 : i32
    return %arg0, %c0_i32 : i32, i32
  }
  func.func @transform_1(%arg0: i32) -> (i32, i32) {
    %c0_i32 = arith.constant 0 : i32
    %c0_i32_0 = arith.constant 0 : i32
    return %arg0, %c0_i32 : i32, i32
  }
  func.func @transform_2(%arg0: i32) -> (i32, i32) {
    %c0_i32 = arith.constant 0 : i32
    %c0_i32_0 = arith.constant 0 : i32
    return %arg0, %c0_i32 : i32, i32
  }
}

</mosaic_0001>

<llo_original>
// kernel: tpu_custom_call.1
$region0: #{tpu_custom_call.1}
  #allocation0 [shape = 'u32[]', space=smem, size = 0x4, offset = 0x4, fixed_abs, tag = 'smem constant byte address 0x4 - core index']
  #allocation1 [shape = 'u32[144,128]{1,0:T(1,128)}', space=vmem, size = 0x12000, scoped, tag = 'internal scratch']
  %s0 = inlined_call_operand.hbm [shape: f32[8,16], index: 0, kind: input, shape index: {}]
  %s1 = inlined_call_operand.hbm [shape: f32[8,16], index: 1, kind: output, shape index: {0}]
  %s2 = inlined_call_operand.hbm [shape: f32[8,16], index: 2, kind: output, shape index: {1}]
  %3 = xla_tuple %s1, %s2
  %s4 = sld [smem:[#allocation0]]
  $region26: #{tpu_custom_call.1} parent=0
    _
  %s6 = ssub.s32 1, %s4
  %s7 = scalar_select 0, %s6, %s4
  $region1: #{tpu_custom_call.1} parent=0
    #allocation2 [shape = 'u8[4096]{0}', space=vmem, size = 0x1000, scoped, tag = 'input window, operand 0, single buffered']
    #allocation3 [shape = 's32[1]{0}', space=sflag, size = 0x4, scoped, tag = 'scoped memory for tpu_custom_call.1']
    #allocation4 [shape = 's32[1]{0}', space=sflag, size = 0x4, scoped, tag = 'scoped memory for tpu_custom_call.1']
    #allocation5 [shape = 'u8[4096]{0}', space=vmem, size = 0x1000, scoped, tag = 'output window, operand 0, single buffered']
    #allocation6 [shape = 'u8[4096]{0}', space=vmem, size = 0x1000, scoped, tag = 'output window, operand 1, single buffered']
    #allocation7 [shape = 's32[1]{0}', space=sflag, size = 0x4, scoped, tag = 'scoped memory for tpu_custom_call.1']
    %8 = vsyncpa [#allocation3], 0
    %9 = vsyncpa [#allocation4], 0
    %10 = vsyncpa [#allocation7], 0
    // Predicated region
    $region2: #{tpu_custom_call.1} parent=1 // pred_check
      _
    $region3: #{tpu_custom_call.1} parent=1 // pred_check_branch
      %12 = sbr.rel (0) target = $region5
    $region4: #{tpu_custom_call.1} parent=1 // pred_region
      %s14 = ssub.s32 128, 128
      %15 = vsyncadd [#allocation3], %s14
      %s17 = sshll.u32 [#allocation2], 4
      %s18 = int_to_ptr.vmem [resolvable:$true] %s17
      %20 = dma.hbm_to_vmem [thread:$0]  %s0, 128, %s18, [#allocation3]
    $region5: #{tpu_custom_call.1} parent=1 // pred_fallthru
      _
    // Predicated region
    $region6: #{tpu_custom_call.1} parent=1 // pred_check
      _
    $region7: #{tpu_custom_call.1} parent=1 // pred_check_branch
      %22 = sbr.rel (0) target = $region9
    $region8: #{tpu_custom_call.1} parent=1 // pred_region
      %23 = dma.done [#allocation3], 128
    $region9: #{tpu_custom_call.1} parent=1 // pred_fallthru
      _
    %v24 = vld [vmem:[#allocation2] sm:$0xff]
    %vm25 = vcmask 130048
    %v26 = vsel %vm25, %v24, 0.0
    %27 = vadd.xlane.f32.xlu0 %v26
    %v28 = vpop.xlane.xlu0 %27
    %v29 = vrcp.pop 16.0
    %v30 = vmul.f32 %v28, %v29
    %v31 = vsub.f32 %v24, %v30
    %v32 = vmul.f32 %v31, %v31
    %vm33 = vcmask 1047680
    %34 = vrot.lane.b32.xlu0 %v31, 16
    %v35 = vpop.permute.xlu0 %34
    %v36 = vsel %vm33, %v35, %v31
    %37 = vrot.lane.b32.xlu0 %v36, 16
    %v38 = vpop.permute.xlu0 %37
    %v39 = vsel %vm33, %v38, %v31
    %41 = vrot.lane.b32.xlu0 %v39, 127
    %v42 = vpop.permute.xlu0 %41
    %v44 = vadd.f32 %v31, %v42
    %v45 = vmul.f32 %v39, %v39
    %47 = vrot.lane.b32.xlu0 %v45, 127
    %v48 = vpop.permute.xlu0 %47
    %v50 = vadd.f32 %v32, %v48
    %51 = vrot.lane.b32.xlu0 %v39, 126
    %v52 = vpop.permute.xlu0 %51
    %v54 = vadd.f32 %v44, %v52
    %55 = vrot.lane.b32.xlu0 %v45, 126
    %v56 = vpop.permute.xlu0 %55
    %v58 = vadd.f32 %v50, %v56
    %59 = vrot.lane.b32.xlu0 %v39, 125
    %v60 = vpop.permute.xlu0 %59
    %v62 = vadd.f32 %v54, %v60
    %63 = vrot.lane.b32.xlu0 %v45, 125
    %v64 = vpop.permute.xlu0 %63
    %v66 = vadd.f32 %v58, %v64
    %67 = vrot.lane.b32.xlu0 %v39, 124
    %v68 = vpop.permute.xlu0 %67
    %v70 = vadd.f32 %v62, %v68
    %71 = vrot.lane.b32.xlu0 %v45, 124
    %v72 = vpop.permute.xlu0 %71
    %v74 = vadd.f32 %v66, %v72
    %75 = vrot.lane.b32.xlu0 %v39, 123
    %v76 = vpop.permute.xlu0 %75
    %v78 = vadd.f32 %v70, %v76
    %79 = vrot.lane.b32.xlu0 %v45, 123
    %v80 = vpop.permute.xlu0 %79
    %v82 = vadd.f32 %v74, %v80
    %83 = vrot.lane.b32.xlu0 %v39, 122
    %v84 = vpop.permute.xlu0 %83
    %v86 = vadd.f32 %v78, %v84
    %87 = vrot.lane.b32.xlu0 %v45, 122
    %v88 = vpop.permute.xlu0 %87
    %v90 = vadd.f32 %v82, %v88
    %91 = vrot.lane.b32.xlu0 %v39, 121
    %v92 = vpop.permute.xlu0 %91
    %v94 = vadd.f32 %v86, %v92
    %95 = vrot.lane.b32.xlu0 %v45, 121
    %v96 = vpop.permute.xlu0 %95
    %v98 = vadd.f32 %v90, %v96
    %v99 = vmul.f32 %v94, 0.125
    %v100 = vmul.f32 %v98, 0.125
    %v101 = vmul.f32 %v99, %v99
    %v102 = vsub.f32 %v100, %v101
    %v103 = vmax.f32 %v102, 0.0
    %v104 = vrsqrt.pop %v103
    %v105 = vmul.f32 %v103, %v104
    %vm106 = vcmp.eq.f32.partialorder %v103, inf
    %v107 = vsel %vm106, %v103, %v105
    %vm108 = vcmp.eq.f32.partialorder %v103, 0.0
    %v109 = vand.u32 %v103, 2147483648
    %v110 = vsel %vm108, %v109, %v107
    %111 = vrot.lane.b32.xlu0 %v110, 16
    %v112 = vpop.permute.xlu0 %111
    %v113 = vsel %vm33, %v112, %v110
    %114 = vrot.lane.b32.xlu0 %v113, 16
    %v115 = vpop.permute.xlu0 %114
    %v116 = vsel %vm33, %v115, %v110
    %v117 = vlaneseq
    %v118 = vand.u32 %v117, 127
    %vm119 = vcmp.ge.s32.totalorder %v118, 3
    %vm120 = vcmp.lt.s32.totalorder %v118, 12
    %vm121 = vmand %vm119, %vm120
    %123 = vrot.lane.b32.xlu0 %v116, 115
    %v124 = vpop.permute.xlu0 %123
    %v126 = vsel %vm121, %v124, 0.0
    %127 = vst.msk [vmem:[#allocation6] sm:$0xff] %vm25, %v126
    %v128 = vround.ne.pseudo %v126
    %v129 = vmin.f32 %v128, 1.0
    %130 = vst.msk [vmem:[#allocation5] sm:$0xff] %vm25, %v129
    // Predicated region
    $region10: #{tpu_custom_call.1} parent=1 // pred_check
      _
    $region11: #{tpu_custom_call.1} parent=1 // pred_check_branch
      %132 = sbr.rel (0) target = $region13
    $region12: #{tpu_custom_call.1} parent=1 // pred_region
      %s134 = ssub.s32 128, 128
      %135 = vsyncadd [#allocation4], %s134
      %s137 = sshll.u32 [#allocation5], 4
      %s138 = int_to_ptr.vmem [resolvable:$true] %s137
      %140 = dma.vmem_to_hbm [thread:$0]  %s138, 128, %s1, [#allocation4]
    $region13: #{tpu_custom_call.1} parent=1 // pred_fallthru
      _
    // Predicated region
    $region14: #{tpu_custom_call.1} parent=1 // pred_check
      _
    $region15: #{tpu_custom_call.1} parent=1 // pred_check_branch
      %142 = sbr.rel (0) target = $region17
    $region16: #{tpu_custom_call.1} parent=1 // pred_region
      %s144 = ssub.s32 128, 128
      %145 = vsyncadd [#allocation7], %s144
      %s147 = sshll.u32 [#allocation6], 4
      %s148 = int_to_ptr.vmem [resolvable:$true] %s147
      %150 = dma.vmem_to_hbm [thread:$0]  %s148, 128, %s2, [#allocation7]
    $region17: #{tpu_custom_call.1} parent=1 // pred_fallthru
      _
    // Predicated region
    $region18: #{tpu_custom_call.1} parent=1 // pred_check
      _
    $region19: #{tpu_custom_call.1} parent=1 // pred_check_branch
      %152 = sbr.rel (0) target = $region21
    $region20: #{tpu_custom_call.1} parent=1 // pred_region
      %153 = dma.done [#allocation4], 128
    $region21: #{tpu_custom_call.1} parent=1 // pred_fallthru
      _
    // Predicated region
    $region22: #{tpu_custom_call.1} parent=1 // pred_check
      _
    $region23: #{tpu_custom_call.1} parent=1 // pred_check_branch
      %155 = sbr.rel (0) target = $region25
    $region24: #{tpu_custom_call.1} parent=1 // pred_region
      %156 = dma.done [#allocation7], 128
    $region25: #{tpu_custom_call.1} parent=1 // pred_fallthru
      _
    %157 = vsyncpa [#allocation3], 1
    %158 = vsyncpa [#allocation4], 1
    %159 = vsyncpa [#allocation7], 1

</llo_original>
